<compile_context>
chip_gen: v5e
topology: v5e:2x2
jax: 0.10.0
libtpu: 0.0.40
codegen_flags: <defaults>
</compile_context>

<pallas_src>
import functools

import jax
import jax.numpy as jnp
from jax import lax
from jax.experimental import pallas as pl
from jax.experimental.pallas import tpu as pltpu

EPS = 1e-12        # F.normalize default eps
NEG_BIG = -1e30    # finite "minus infinity" for masking padded patch rows


def _l2_normalize(x, axis=-1):
    ss = jnp.sum(x * x, axis=axis, keepdims=True)
    return x * lax.rsqrt(jnp.maximum(ss, EPS * EPS))


def _ver2c_kernel(x_ref, wt_ref, b_ref, desc_ref, segt_ref,
                  m_ref, l_ref, acc_ref, *,
                  n_total, n_tile, tiles_per_split, needs_mask, approx_recip):
    # x_ref   : (1, NT, D)   bf16  patch-feature tile for (batch b, split s)
    # wt_ref  : (D, D)       bf16  visual_proj weight, pre-transposed
    # b_ref   : (1, D)       f32   visual_proj bias
    # desc_ref: (T, D)       bf16  desc features, pre-normalized, * D**-0.5
    # segt_ref: (C, T)       f32   per-class mean-over-descriptions matrix (transposed)
    # m/l/acc : (1, 1, C, 1) f32   online-softmax partials (outputs, resident over n)
    s = pl.program_id(1)
    n = pl.program_id(2)

    @pl.when(n == 0)
    def _init():
        m_ref[...] = jnp.full_like(m_ref, -jnp.inf)
        l_ref[...] = jnp.zeros_like(l_ref)
        acc_ref[...] = jnp.zeros_like(acc_ref)

    # bf16 HBM stream, upcast on the VPU (hidden under the MXU).
    x = x_ref[0].astype(jnp.float32)                       # (NT, D)

    # F.normalize(x_s, dim=-1)
    xn = _l2_normalize(x, axis=-1)

    # visual_proj(xn)  (bf16 MXU, f32 accumulate), then F.normalize in f32.
    proj = jnp.dot(xn.astype(jnp.bfloat16), wt_ref[...],
                   preferred_element_type=jnp.float32) + b_ref[0]
    proj_n = _l2_normalize(proj, axis=-1).astype(jnp.bfloat16)     # (NT, D)

    # compute_patch_scores, lane-dense: sim_T[t, i] = desc[t] . proj_n[i]  -> (T, NT)
    sim_t = lax.dot_general(desc_ref[...], proj_n,
                            (((1,), (1,)), ((), ())),
                            preferred_element_type=jnp.float32)
    # softmax over descriptions (sublane axis T)
    sim_t = sim_t - jnp.max(sim_t, axis=0, keepdims=True)
    e = jnp.exp(sim_t)
    denom = jnp.sum(e, axis=0, keepdims=True)
    if approx_recip:
        attn_t = e * pl.reciprocal(denom, approx=True)
    else:
        attn_t = e / denom                                  # (T, NT)

    # get_class_scores_from_descriptions: per-class mean via (C, T) @ (T, NT)
    cs_t = jnp.dot(segt_ref[...], attn_t,
                   preferred_element_type=jnp.float32)      # (C, NT)

    if needs_mask:
        base = (s * tiles_per_split + n) * n_tile
        cols = base + lax.broadcasted_iota(jnp.int32, (1, n_tile), 1)
        # where() ignores the masked branch, so NaN/Inf from padded/garbage rows
        # cannot leak into the running stats below.
        cs_t = jnp.where(cols < n_total, cs_t, NEG_BIG)

    # Online softmax over the patch (lane) axis:
    #   attn_weights = softmax(class_scores, dim=N); logits = sum_N aw * class_scores
    m_prev = m_ref[0, 0]                                            # (C, 1)
    m_new = jnp.maximum(m_prev, jnp.max(cs_t, axis=1, keepdims=True))
    corr = jnp.exp(m_prev - m_new)
    p = jnp.exp(cs_t - m_new)                                       # (C, NT)
    l_ref[0, 0] = corr * l_ref[0, 0] + jnp.sum(p, axis=1, keepdims=True)
    acc_ref[0, 0] = corr * acc_ref[0, 0] + jnp.sum(p * cs_t, axis=1, keepdims=True)
    m_ref[0, 0] = m_new


def _device_budget():
    """(max patch tile, vmem limit) — generation aware (v5e/v6e 128 MiB, v7x 64 MiB)."""
    try:
        vmem = getattr(pltpu.get_tpu_info(), "vmem_capacity_bytes", None)
    except Exception:  # pragma: no cover - conservative fallback
        vmem = None
    if vmem is not None and vmem >= 100 * 1024 * 1024:
        return 4096, 96 * 1024 * 1024     # v5e / v6e (128 MiB physical VMEM)
    return 2048, 48 * 1024 * 1024         # v7x (64 MiB) or unknown


@functools.partial(jax.jit, static_argnames=("n_tile_override", "n_split_override",
                                              "approx_recip"))
def ver2c_forward(x_s, coord_s, x_l, coord_l, w_proj, b_proj, desc_feats, seg_mat,
                  n_tile_override=None, n_split_override=None, approx_recip=True):
    """Returns (Y_prob, Y_hat). coord_s / coord_l / x_l are unused by the forward
    (matching the PyTorch module), but kept in the signature for fidelity."""
    del coord_s, x_l, coord_l
    if x_s.ndim == 2:
        x_s = x_s[None]
    B, N, Dm = x_s.shape
    T = desc_feats.shape[0]
    C = seg_mat.shape[1]

    n_tile_max, vmem_limit = _device_budget()
    n_tile = n_tile_override if n_tile_override is not None else min(N, n_tile_max)
    n_blocks = pl.cdiv(N, n_tile)
    if n_split_override is not None:
        num_splits = n_split_override
    else:
        # v7x megacore: with B == 1 the batch axis gives no second-core work,
        # so split the patch-tile axis across cores instead.
        num_splits = 2 if (B == 1 and n_blocks >= 2) else 1
    tiles_per_split = pl.cdiv(n_blocks, num_splits)
    needs_mask = (num_splits * tiles_per_split * n_tile) != N

    # Grid-invariant preprocessing hoisted out of the kernel.
    x_bf = x_s if x_s.dtype == jnp.bfloat16 else x_s.astype(jnp.bfloat16)
    wt = w_proj.T.astype(jnp.bfloat16)                     # (D, D), proj = x @ wt + b
    b2 = b_proj[None, :].astype(jnp.float32)               # (1, D)
    d = _l2_normalize(desc_feats.astype(jnp.float32), axis=-1)
    d = (d * (Dm ** -0.5)).astype(jnp.bfloat16)            # (T, D), scale folded in
    segt = seg_mat.T.astype(jnp.float32)                   # (C, T)

    kernel = functools.partial(
        _ver2c_kernel, n_total=N, n_tile=n_tile,
        tiles_per_split=tiles_per_split, needs_mask=needs_mask,
        approx_recip=approx_recip)

    # Clamp the block index so splits that run past the last tile re-read the
    # last valid block (its contribution is fully masked via the global column
    # index computed inside the kernel).
    x_map = lambda b, s, n: (b, jnp.minimum(s * tiles_per_split + n, n_blocks - 1), 0)
    const2 = lambda b, s, n: (0, 0)
    out_map = lambda b, s, n: (b, s, 0, 0)

    stat_shape = jax.ShapeDtypeStruct((B, num_splits, C, 1), jnp.float32)
    stat_spec = pl.BlockSpec((1, 1, C, 1), out_map)

    flops = 2 * B * N * Dm * (Dm + T) + 2 * B * N * T * C
    transcendentals = B * N * (T + C + 2)
    bytes_accessed = (x_bf.size * 2 + wt.size * 2 + d.size * 2 +
                      segt.size * 4 + b2.size * 4 + 3 * B * num_splits * C * 4)

    m_p, l_p, acc_p = pl.pallas_call(
        kernel,
        out_shape=(stat_shape, stat_shape, stat_shape),
        grid_spec=pltpu.PrefetchScalarGridSpec(
            num_scalar_prefetch=0,
            grid=(B, num_splits, tiles_per_split),
            in_specs=[
                pl.BlockSpec((1, n_tile, Dm), x_map),
                pl.BlockSpec((Dm, Dm), const2),
                pl.BlockSpec((1, Dm), const2),
                pl.BlockSpec((T, Dm), const2),
                pl.BlockSpec((C, T), const2),
            ],
            out_specs=[stat_spec, stat_spec, stat_spec],
        ),
        compiler_params=pltpu.CompilerParams(
            dimension_semantics=("parallel", "parallel", "arbitrary"),
            vmem_limit_bytes=vmem_limit,
        ),
        cost_estimate=pl.CostEstimate(
            flops=int(flops),
            transcendentals=int(transcendentals),
            bytes_accessed=int(bytes_accessed)),
    )(x_bf, wt, b2, d, segt)

    # Merge the per-split online-softmax partials (trivial JAX), then the final
    # class softmax + argmax.  A fully-padded split has m == NEG_BIG, so its
    # corr underflows to 0 and it contributes nothing.
    m = m_p[..., 0]        # (B, S, C)
    l = l_p[..., 0]
    acc = acc_p[..., 0]
    m_g = jnp.max(m, axis=1, keepdims=True)
    corr = jnp.exp(m - m_g)
    l_g = jnp.sum(l * corr, axis=1)
    acc_g = jnp.sum(acc * corr, axis=1)
    logits = acc_g / l_g                                    # (B, C)
    probs = jax.nn.softmax(logits, axis=-1)
    y_hat = jnp.argmax(probs, axis=1)
    return probs, y_hat


def _reference_forward(x_s, w_proj, b_proj, desc_feats, seg_mat):
    """Pure-JAX f32 reference of the PyTorch forward (inference path)."""
    Dm = x_s.shape[-1]
    xn = _l2_normalize(x_s, axis=-1)
    proj = jnp.einsum("bnd,ed->bne", xn, w_proj) + b_proj          # nn.Linear
    x_proj = _l2_normalize(proj, axis=-1)
    d = _l2_normalize(desc_feats, axis=-1)
    sim = jnp.einsum("bnd,td->bnt", x_proj, d) * (Dm ** -0.5)
    attn = jax.nn.softmax(sim, axis=-1)
    cs = jnp.einsum("bnt,tc->bnc", attn, seg_mat)
    aw = jax.nn.softmax(cs, axis=1)
    logits = jnp.sum(aw * cs, axis=1)
    return jax.nn.softmax(logits, axis=1)


if __name__ == "__main__":
    # Small, module-consistent shapes.
    B, N, D = 2, 8, 32          # batch, patches per slide, feature dim (feat_dim)
    C = 4                       # num_classes
    descs_per_class = 2
    T = C * descs_per_class     # total number of text description prompts

    key = jax.random.PRNGKey(0)
    k_x, k_xl, k_w, k_b, k_d, k_c, k_x2 = jax.random.split(key, 7)

    x_s = jax.random.normal(k_x, (B, N, D), dtype=jnp.float32)
    x_l = jax.random.normal(k_xl, (B, N, D), dtype=jnp.float32)
    coord_s = jax.random.uniform(k_c, (B, N, 2), dtype=jnp.float32)
    coord_l = coord_s

    # visual_proj = nn.Linear(feat_dim, feat_dim)
    w_proj = jax.random.normal(k_w, (D, D), dtype=jnp.float32) * (1.0 / jnp.sqrt(D))
    b_proj = jax.random.normal(k_b, (D,), dtype=jnp.float32) * 0.01

    # TODO(synk): desc_text_features come from the CONCH text encoder + tokenizer in
    # the original module; here they are deterministic unit-normalized random vectors.
    desc_feats = _l2_normalize(
        jax.random.normal(k_d, (T, D), dtype=jnp.float32), axis=-1)

    # class_to_desc_idx: contiguous, equal-size slices; expressed as a (T, C) mean matrix.
    seg_mat = jnp.zeros((T, C), dtype=jnp.float32)
    for c in range(C):
        s0, e0 = c * descs_per_class, (c + 1) * descs_per_class
        seg_mat = seg_mat.at[s0:e0, c].set(1.0 / (e0 - s0))

    # --- test 1: single-tile, single-split path ---
    y_prob, y_hat = ver2c_forward(
        x_s, coord_s, x_l, coord_l, w_proj, b_proj, desc_feats, seg_mat)
    y_prob = jax.block_until_ready(y_prob)
    y_hat = jax.block_until_ready(y_hat)
    ref = _reference_forward(x_s, w_proj, b_proj, desc_feats, seg_mat)
    assert y_prob.shape == (B, C) and y_hat.shape == (B,)
    assert jnp.allclose(y_prob, ref, atol=2e-3, rtol=2e-3), "mismatch (single tile)"

    # --- test 2: multi-tile, 2-way split path with padded / out-of-range tiles ---
    N2 = 20                       # 3 tiles of 8 -> split as 2+1(+1 clamped duplicate)
    x_s2 = jax.random.normal(k_x2, (B, N2, D), dtype=jnp.float32)
    coord_s2 = jnp.zeros((B, N2, 2), dtype=jnp.float32)
    y_prob2, y_hat2 = ver2c_forward(
        x_s2, coord_s2, x_s2, coord_s2, w_proj, b_proj, desc_feats, seg_mat,
        n_tile_override=8, n_split_override=2)
    y_prob2 = jax.block_until_ready(y_prob2)
    ref2 = _reference_forward(x_s2, w_proj, b_proj, desc_feats, seg_mat)
    assert y_prob2.shape == (B, C) and y_hat2.shape == (B,)
    assert jnp.allclose(y_prob2, ref2, atol=2e-3, rtol=2e-3), "mismatch (split/masked)"

    print("KERNEL_OK")
</pallas_src>

<mosaic_0001>
module attributes {stable_mosaic.version = 11 : i64} {
  func.func @_ver2c_kernel(%arg0: i32, %arg1: i32, %arg2: i32, %arg3: memref<1x8x32xbf16, #tpu.memory_space<vmem>>, %arg4: memref<32x32xbf16, #tpu.memory_space<vmem>>, %arg5: memref<1x32xf32, #tpu.memory_space<vmem>>, %arg6: memref<8x32xbf16, #tpu.memory_space<vmem>>, %arg7: memref<4x8xf32, #tpu.memory_space<vmem>>, %arg8: memref<1x1x4x1xf32, #tpu.memory_space<vmem>>, %arg9: memref<1x1x4x1xf32, #tpu.memory_space<vmem>>, %arg10: memref<1x1x4x1xf32, #tpu.memory_space<vmem>>) attributes {dimension_semantics = [#tpu.dimension_semantics<parallel>, #tpu.dimension_semantics<parallel>, #tpu.dimension_semantics<arbitrary>], iteration_bounds = array<i64: 2, 1, 1>, scalar_prefetch = 0 : i64, scratch_operands = 0 : i64, tpu.core_type = #tpu.core_type<tc>, window_params = [{transform_indices = @transform_0, window_bounds = array<i64: 1, 8, 32>}, {pipeline_mode = #tpu.pipeline_mode<synchronous>, transform_indices = @transform_1, window_bounds = array<i64: 32, 32>}, {pipeline_mode = #tpu.pipeline_mode<synchronous>, transform_indices = @transform_2, window_bounds = array<i64: 1, 32>}, {pipeline_mode = #tpu.pipeline_mode<synchronous>, transform_indices = @transform_3, window_bounds = array<i64: 8, 32>}, {pipeline_mode = #tpu.pipeline_mode<synchronous>, transform_indices = @transform_4, window_bounds = array<i64: 4, 8>}, {transform_indices = @transform_5, window_bounds = array<i64: 1, 1, 4, 1>}, {transform_indices = @transform_6, window_bounds = array<i64: 1, 1, 4, 1>}, {transform_indices = @transform_7, window_bounds = array<i64: 1, 1, 4, 1>}]} {
    %c0_i32 = arith.constant 0 : i32
    %0 = arith.cmpi eq, %arg2, %c0_i32 : i32
    %1 = arith.extui %0 : i1 to i32
    %c0_i32_0 = arith.constant 0 : i32
    %2 = arith.cmpi ne, %1, %c0_i32_0 : i32
    scf.if %2 {
      %cst_46 = arith.constant 0xFF800000 : f32
      %77 = vector.broadcast %cst_46 : f32 to vector<1x1x4x1xf32>
      %c0_47 = arith.constant 0 : index
      %c0_48 = arith.constant 0 : index
      %c0_49 = arith.constant 0 : index
      %c0_50 = arith.constant 0 : index
      %78 = vector.load %arg8[%c0_47, %c0_48, %c0_49, %c0_50] : memref<1x1x4x1xf32, #tpu.memory_space<vmem>>, vector<1x1x4x1xf32>
      tpu.vector_store %arg8[%c0_47, %c0_48, %c0_49, %c0_50], %77 {strides = array<i32>} : memref<1x1x4x1xf32, #tpu.memory_space<vmem>>, vector<1x1x4x1xf32>,
      %cst_51 = arith.constant 0.000000e+00 : f32
      %79 = vector.broadcast %cst_51 : f32 to vector<1x1x4x1xf32>
      %c0_52 = arith.constant 0 : index
      %c0_53 = arith.constant 0 : index
      %c0_54 = arith.constant 0 : index
      %c0_55 = arith.constant 0 : index
      %80 = vector.load %arg9[%c0_52, %c0_53, %c0_54, %c0_55] : memref<1x1x4x1xf32, #tpu.memory_space<vmem>>, vector<1x1x4x1xf32>
      tpu.vector_store %arg9[%c0_52, %c0_53, %c0_54, %c0_55], %79 {strides = array<i32>} : memref<1x1x4x1xf32, #tpu.memory_space<vmem>>, vector<1x1x4x1xf32>,
      %cst_56 = arith.constant 0.000000e+00 : f32
      %81 = vector.broadcast %cst_56 : f32 to vector<1x1x4x1xf32>
      %c0_57 = arith.constant 0 : index
      %c0_58 = arith.constant 0 : index
      %c0_59 = arith.constant 0 : index
      %c0_60 = arith.constant 0 : index
      %82 = vector.load %arg10[%c0_57, %c0_58, %c0_59, %c0_60] : memref<1x1x4x1xf32, #tpu.memory_space<vmem>>, vector<1x1x4x1xf32>
      tpu.vector_store %arg10[%c0_57, %c0_58, %c0_59, %c0_60], %81 {strides = array<i32>} : memref<1x1x4x1xf32, #tpu.memory_space<vmem>>, vector<1x1x4x1xf32>,
    } else {
    }
    %c0 = arith.constant 0 : index
    %c0_1 = arith.constant 0 : index
    %c0_2 = arith.constant 0 : index
    %3 = vector.load %arg3[%c0, %c0_1, %c0_2] : memref<1x8x32xbf16, #tpu.memory_space<vmem>>, vector<1x8x32xbf16>
    %4 = vector.shape_cast %3 : vector<1x8x32xbf16> to vector<8x32xbf16>
    %5 = arith.extf %4 : vector<8x32xbf16> to vector<8x32xf32>
    %6 = arith.mulf %5, %5 : vector<8x32xf32>
    %cst = arith.constant dense<0.000000e+00> : vector<8xf32>
    %7 = vector.multi_reduction <add>, %6, %cst [1] : vector<8x32xf32> to vector<8xf32>
    %8 = vector.shape_cast %7 : vector<8xf32> to vector<8x1xf32>
    %cst_3 = arith.constant 1.000000e-24 : f32
    %9 = vector.broadcast %cst_3 : f32 to vector<8x1xf32>
    %10 = arith.maximumf %8, %9 : vector<8x1xf32>
    %11 = math.rsqrt %10 : vector<8x1xf32>
    %12 = vector.broadcast %11 : vector<8x1xf32> to vector<8x32xf32>
    %13 = arith.mulf %5, %12 : vector<8x32xf32>
    %14 = arith.truncf %13 : vector<8x32xf32> to vector<8x32xbf16>
    %c0_4 = arith.constant 0 : index
    %c0_5 = arith.constant 0 : index
    %15 = vector.load %arg4[%c0_4, %c0_5] : memref<32x32xbf16, #tpu.memory_space<vmem>>, vector<32x32xbf16>
    %cst_6 = arith.constant dense<0.000000e+00> : vector<8x32xf32>
    %16 = tpu.matmul %14, %15, %cst_6 {dimension_numbers = #tpu.dot_dimension_numbers<[1], [0], [0], [1], [0, 0, 1, 1], [], []>} : vector<8x32xbf16>, vector<32x32xbf16>, vector<8x32xf32> -> vector<8x32xf32>
    %c0_7 = arith.constant 0 : index
    %c0_8 = arith.constant 0 : index
    %17 = vector.load %arg5[%c0_7, %c0_8] : memref<1x32xf32, #tpu.memory_space<vmem>>, vector<1x32xf32>
    %18 = vector.shape_cast %17 : vector<1x32xf32> to vector<32xf32>
    %19 = vector.shape_cast %18 : vector<32xf32> to vector<1x32xf32>
    %20 = vector.broadcast %19 : vector<1x32xf32> to vector<8x32xf32>
    %21 = arith.addf %16, %20 : vector<8x32xf32>
    %22 = arith.mulf %21, %21 : vector<8x32xf32>
    %cst_9 = arith.constant dense<0.000000e+00> : vector<8xf32>
    %23 = vector.multi_reduction <add>, %22, %cst_9 [1] : vector<8x32xf32> to vector<8xf32>
    %24 = vector.shape_cast %23 : vector<8xf32> to vector<8x1xf32>
    %cst_10 = arith.constant 1.000000e-24 : f32
    %25 = vector.broadcast %cst_10 : f32 to vector<8x1xf32>
    %26 = arith.maximumf %24, %25 : vector<8x1xf32>
    %27 = math.rsqrt %26 : vector<8x1xf32>
    %28 = vector.broadcast %27 : vector<8x1xf32> to vector<8x32xf32>
    %29 = arith.mulf %21, %28 : vector<8x32xf32>
    %30 = arith.truncf %29 : vector<8x32xf32> to vector<8x32xbf16>
    %c0_11 = arith.constant 0 : index
    %c0_12 = arith.constant 0 : index
    %31 = vector.load %arg6[%c0_11, %c0_12] : memref<8x32xbf16, #tpu.memory_space<vmem>>, vector<8x32xbf16>
    %cst_13 = arith.constant dense<0.000000e+00> : vector<8x8xf32>
    %32 = tpu.matmul %31, %30, %cst_13 {dimension_numbers = #tpu.dot_dimension_numbers<[1], [1], [0], [0], [0, 0, 1, 0], [], []>} : vector<8x32xbf16>, vector<8x32xbf16>, vector<8x8xf32> -> vector<8x8xf32>
    %cst_14 = arith.constant dense<0xFF800000> : vector<8xf32>
    %33 = vector.multi_reduction <maximumf>, %32, %cst_14 [0] : vector<8x8xf32> to vector<8xf32>
    %34 = vector.shape_cast %33 : vector<8xf32> to vector<1x8xf32>
    %35 = vector.broadcast %34 : vector<1x8xf32> to vector<8x8xf32>
    %36 = arith.subf %32, %35 : vector<8x8xf32>
    %37 = math.exp %36 : vector<8x8xf32>
    %cst_15 = arith.constant dense<0.000000e+00> : vector<8xf32>
    %38 = vector.multi_reduction <add>, %37, %cst_15 [0] : vector<8x8xf32> to vector<8xf32>
    %39 = vector.shape_cast %38 : vector<8xf32> to vector<1x8xf32>
    %40 = tpu.reciprocal %39 {approx = true} : vector<1x8xf32> -> vector<1x8xf32>
    %41 = vector.broadcast %40 : vector<1x8xf32> to vector<8x8xf32>
    %42 = arith.mulf %37, %41 : vector<8x8xf32>
    %c0_16 = arith.constant 0 : index
    %c0_17 = arith.constant 0 : index
    %43 = vector.load %arg7[%c0_16, %c0_17] : memref<4x8xf32, #tpu.memory_space<vmem>>, vector<4x8xf32>
    %cst_18 = arith.constant dense<0.000000e+00> : vector<4x8xf32>
    %44 = tpu.matmul %43, %42, %cst_18 {dimension_numbers = #tpu.dot_dimension_numbers<[1], [0], [0], [1], [0, 0, 1, 1], [], []>} : vector<4x8xf32>, vector<8x8xf32>, vector<4x8xf32> -> vector<4x8xf32>
    %c0_19 = arith.constant 0 : index
    %c0_20 = arith.constant 0 : index
    %c0_21 = arith.constant 0 : index
    %c0_22 = arith.constant 0 : index
    %45 = vector.load %arg8[%c0_19, %c0_20, %c0_21, %c0_22] : memref<1x1x4x1xf32, #tpu.memory_space<vmem>>, vector<1x1x4x1xf32>
    %46 = vector.shape_cast %45 : vector<1x1x4x1xf32> to vector<4x1xf32>
    %cst_23 = arith.constant dense<0xFF800000> : vector<4xf32>
    %47 = vector.multi_reduction <maximumf>, %44, %cst_23 [1] : vector<4x8xf32> to vector<4xf32>
    %48 = vector.shape_cast %47 : vector<4xf32> to vector<4x1xf32>
    %49 = arith.maximumf %46, %48 : vector<4x1xf32>
    %50 = arith.subf %46, %49 : vector<4x1xf32>
    %51 = math.exp %50 : vector<4x1xf32>
    %52 = vector.broadcast %49 : vector<4x1xf32> to vector<4x8xf32>
    %53 = arith.subf %44, %52 : vector<4x8xf32>
    %54 = math.exp %53 : vector<4x8xf32>
    %c0_24 = arith.constant 0 : index
    %c0_25 = arith.constant 0 : index
    %c0_26 = arith.constant 0 : index
    %c0_27 = arith.constant 0 : index
    %55 = vector.load %arg9[%c0_24, %c0_25, %c0_26, %c0_27] : memref<1x1x4x1xf32, #tpu.memory_space<vmem>>, vector<1x1x4x1xf32>
    %56 = vector.shape_cast %55 : vector<1x1x4x1xf32> to vector<4x1xf32>
    %57 = arith.mulf %51, %56 : vector<4x1xf32>
    %cst_28 = arith.constant dense<0.000000e+00> : vector<4xf32>
    %58 = vector.multi_reduction <add>, %54, %cst_28 [1] : vector<4x8xf32> to vector<4xf32>
    %59 = vector.shape_cast %58 : vector<4xf32> to vector<4x1xf32>
    %60 = arith.addf %57, %59 : vector<4x1xf32>
    %c0_29 = arith.constant 0 : index
    %c0_30 = arith.constant 0 : index
    %c0_31 = arith.constant 0 : index
    %c0_32 = arith.constant 0 : index
    %61 = vector.load %arg9[%c0_29, %c0_30, %c0_31, %c0_32] : memref<1x1x4x1xf32, #tpu.memory_space<vmem>>, vector<1x1x4x1xf32>
    %62 = vector.shape_cast %61 : vector<1x1x4x1xf32> to vector<4x1xf32>
    %63 = vector.shape_cast %60 : vector<4x1xf32> to vector<1x1x4x1xf32>
    tpu.vector_store %arg9[%c0_29, %c0_30, %c0_31, %c0_32], %63 {strides = array<i32>} : memref<1x1x4x1xf32, #tpu.memory_space<vmem>>, vector<1x1x4x1xf32>,
    %c0_33 = arith.constant 0 : index
    %c0_34 = arith.constant 0 : index
    %c0_35 = arith.constant 0 : index
    %c0_36 = arith.constant 0 : index
    %64 = vector.load %arg10[%c0_33, %c0_34, %c0_35, %c0_36] : memref<1x1x4x1xf32, #tpu.memory_space<vmem>>, vector<1x1x4x1xf32>
    %65 = vector.shape_cast %64 : vector<1x1x4x1xf32> to vector<4x1xf32>
    %66 = arith.mulf %51, %65 : vector<4x1xf32>
    %67 = arith.mulf %54, %44 : vector<4x8xf32>
    %cst_37 = arith.constant dense<0.000000e+00> : vector<4xf32>
    %68 = vector.multi_reduction <add>, %67, %cst_37 [1] : vector<4x8xf32> to vector<4xf32>
    %69 = vector.shape_cast %68 : vector<4xf32> to vector<4x1xf32>
    %70 = arith.addf %66, %69 : vector<4x1xf32>
    %c0_38 = arith.constant 0 : index
    %c0_39 = arith.constant 0 : index
    %c0_40 = arith.constant 0 : index
    %c0_41 = arith.constant 0 : index
    %71 = vector.load %arg10[%c0_38, %c0_39, %c0_40, %c0_41] : memref<1x1x4x1xf32, #tpu.memory_space<vmem>>, vector<1x1x4x1xf32>
    %72 = vector.shape_cast %71 : vector<1x1x4x1xf32> to vector<4x1xf32>
    %73 = vector.shape_cast %70 : vector<4x1xf32> to vector<1x1x4x1xf32>
    tpu.vector_store %arg10[%c0_38, %c0_39, %c0_40, %c0_41], %73 {strides = array<i32>} : memref<1x1x4x1xf32, #tpu.memory_space<vmem>>, vector<1x1x4x1xf32>,
    %c0_42 = arith.constant 0 : index
    %c0_43 = arith.constant 0 : index
    %c0_44 = arith.constant 0 : index
    %c0_45 = arith.constant 0 : index
    %74 = vector.load %arg8[%c0_42, %c0_43, %c0_44, %c0_45] : memref<1x1x4x1xf32, #tpu.memory_space<vmem>>, vector<1x1x4x1xf32>
    %75 = vector.shape_cast %74 : vector<1x1x4x1xf32> to vector<4x1xf32>
    %76 = vector.shape_cast %49 : vector<4x1xf32> to vector<1x1x4x1xf32>
    tpu.vector_store %arg8[%c0_42, %c0_43, %c0_44, %c0_45], %76 {strides = array<i32>} : memref<1x1x4x1xf32, #tpu.memory_space<vmem>>, vector<1x1x4x1xf32>,
    return
  }
  func.func @transform_0(%arg0: i32, %arg1: i32, %arg2: i32) -> (i32, i32, i32) {
    %c1_i32 = arith.constant 1 : i32
    %0 = arith.muli %arg1, %c1_i32 : i32
    %1 = arith.addi %0, %arg2 : i32
    %c0_i32 = arith.constant 0 : i32
    %2 = arith.minsi %1, %c0_i32 : i32
    %c0_i32_0 = arith.constant 0 : i32
    %c0_i32_1 = arith.constant 0 : i32
    return %arg0, %2, %c0_i32_0 : i32, i32, i32
  }
  func.func @transform_1(%arg0: i32, %arg1: i32, %arg2: i32) -> (i32, i32) {
    %c0_i32 = arith.constant 0 : i32
    %c0_i32_0 = arith.constant 0 : i32
    %c0_i32_1 = arith.constant 0 : i32
    return %c0_i32, %c0_i32_0 : i32, i32
  }
  func.func @transform_2(%arg0: i32, %arg1: i32, %arg2: i32) -> (i32, i32) {
    %c0_i32 = arith.constant 0 : i32
    %c0_i32_0 = arith.constant 0 : i32
    %c0_i32_1 = arith.constant 0 : i32
    return %c0_i32, %c0_i32_0 : i32, i32
  }
  func.func @transform_3(%arg0: i32, %arg1: i32, %arg2: i32) -> (i32, i32) {
    %c0_i32 = arith.constant 0 : i32
    %c0_i32_0 = arith.constant 0 : i32
    %c0_i32_1 = arith.constant 0 : i32
    return %c0_i32, %c0_i32_0 : i32, i32
  }
  func.func @transform_4(%arg0: i32, %arg1: i32, %arg2: i32) -> (i32, i32) {
    %c0_i32 = arith.constant 0 : i32
    %c0_i32_0 = arith.constant 0 : i32
    %c0_i32_1 = arith.constant 0 : i32
    return %c0_i32, %c0_i32_0 : i32, i32
  }
  func.func @transform_5(%arg0: i32, %arg1: i32, %arg2: i32) -> (i32, i32, i32, i32) {
    %c0_i32 = arith.constant 0 : i32
    %c0_i32_0 = arith.constant 0 : i32
    %c0_i32_1 = arith.constant 0 : i32
    return %arg0, %arg1, %c0_i32, %c0_i32_0 : i32, i32, i32, i32
  }
  func.func @transform_6(%arg0: i32, %arg1: i32, %arg2: i32) -> (i32, i32, i32, i32) {
    %c0_i32 = arith.constant 0 : i32
    %c0_i32_0 = arith.constant 0 : i32
    %c0_i32_1 = arith.constant 0 : i32
    return %arg0, %arg1, %c0_i32, %c0_i32_0 : i32, i32, i32, i32
  }
  func.func @transform_7(%arg0: i32, %arg1: i32, %arg2: i32) -> (i32, i32, i32, i32) {
    %c0_i32 = arith.constant 0 : i32
    %c0_i32_0 = arith.constant 0 : i32
    %c0_i32_1 = arith.constant 0 : i32
    return %arg0, %arg1, %c0_i32, %c0_i32_0 : i32, i32, i32, i32
  }
}

</mosaic_0001>

<llo_original>
// kernel: ver2c_forward.1
$region0: #{ver2c_forward.1}
  #allocation0 [shape = 'u32[]', space=smem, size = 0x4, offset = 0x4, fixed_abs, tag = 'smem constant byte address 0x4 - core index']
  #allocation1 [shape = 'u32[72,128]{1,0:T(1,128)}', space=vmem, size = 0x9000, scoped, tag = 'internal scratch']
  %s0 = inlined_call_operand.vmem [shape: bf16[2,8,32], index: 0, kind: input, shape index: {}]
  %s1 = inlined_call_operand.vmem [shape: bf16[32,32], index: 1, kind: input, shape index: {}]
  %s2 = inlined_call_operand.vmem [shape: f32[1,32], index: 2, kind: input, shape index: {}]
  %s3 = inlined_call_operand.vmem [shape: bf16[8,32], index: 3, kind: input, shape index: {}]
  %s4 = inlined_call_operand.vmem [shape: f32[4,8], index: 4, kind: input, shape index: {}]
  %s5 = inlined_call_operand.vmem [shape: f32[2,1,4,1], index: 5, kind: output, shape index: {0}]
  %s6 = inlined_call_operand.vmem [shape: f32[2,1,4,1], index: 6, kind: output, shape index: {1}]
  %s7 = inlined_call_operand.vmem [shape: f32[2,1,4,1], index: 7, kind: output, shape index: {2}]
  %8 = xla_tuple %s5, %s6, %s7
  %s9 = sld [smem:[#allocation0]]
  $region73: #{ver2c_forward.1} parent=0
    _
  %s11 = ssub.s32 1, %s9
  %s12 = scalar_select 0, %s11, %s9
  loop: start=0, step=1, limit=4
  $region2: #{ver2c_forward.1} parent=0 // loop_pre_header
    _
  $region3: #{ver2c_forward.1} parent=0 // loop_header
    %s14 = sphi 0, %s18
    %p15 = scmp.ge.s32.totalorder %s14, 4
    %s21 = sphi 0, %s40
    %s22 = sphi 0, %s36
    %s23 = sphi 0, %s32
    %s24 = sphi 0, %s21
    %s25 = sphi 0, %s22
    %s26 = sphi 0, %s23
    %s27 = sphi 0, %s24
    %s28 = sphi 0, %s25
    %s29 = sphi 0, %s26
    %s51 = sphi 0, %s53
    %s54 = sphi 0, %s51
    %s55 = sphi 0, %s54
    %s71 = sphi 0, %s55
    %s75 = sphi 0, %s75
    %s77 = sphi 0, %s75
    %s78 = sphi 0, %s77
    %s92 = sphi 0, %s78
    %s96 = sphi 0, %s96
    %s98 = sphi 0, %s96
    %s99 = sphi 0, %s98
    %s113 = sphi 0, %s99
    %s117 = sphi 0, %s117
    %s119 = sphi 0, %s117
    %s120 = sphi 0, %s119
    %s134 = sphi 0, %s120
    %s138 = sphi 0, %s138
    %s140 = sphi 0, %s138
    %s141 = sphi 0, %s140
    %s155 = sphi 0, %s141
    %s163 = sphi 0, %s165
    %s166 = sphi 0, %s163
    %s167 = sphi 0, %s166
    %s183 = sphi 0, %s167
    %s191 = sphi 0, %s193
    %s194 = sphi 0, %s191
    %s195 = sphi 0, %s194
    %s211 = sphi 0, %s195
    %s219 = sphi 0, %s221
    %s222 = sphi 0, %s219
    %s223 = sphi 0, %s222
    %s239 = sphi 0, %s223
  $region4: #{ver2c_forward.1} parent=0 // loop_header_branch
    %17 = sbr.rel (%p15) target = $region8
  $region5: #{ver2c_forward.1} parent=0 // loop_body
    %s19 = ssub.s32 %s14, 1
    %s20 = ssub.s32 %s14, 2
    %s30 = sadd.s32 1, %s23
    %p31 = scmp.ge.s32.totalorder %s30, 1
    %s32 = scalar_select %p31, 0, %s30
    %s33 = sadd.s32 1, %s22
    %s34 = scalar_select %p31, %s33, %s22
    %p35 = scmp.ge.s32.totalorder %s34, 1
    %s36 = scalar_select %p35, 0, %s34
    %s37 = sadd.s32 1, %s21
    %s38 = scalar_select %p35, %s37, %s21
    %p39 = scmp.ge.s32.totalorder %s38, 2
    %s40 = scalar_select %p39, 0, %s38
    %s41 = sadd.s32 %s22, %s23
    %p42 = scmp.lt.s32.totalorder %s41, 0
    %s43 = scalar_select %p42, %s41, 0
    %s44 = sadd.s32 %s36, %s32
    %p45 = scmp.lt.s32.totalorder %s44, 0
    %s46 = scalar_select %p45, %s44, 0
    %s47 = ssub.s32 %s21, %s40
    %s48 = ssub.s32 %s43, %s46
    %s49 = sor.u32 %s47, %s48
    %p50 = scmp.eq.s32.totalorder %s49, 0
    %s52 = sadd.s32 %s51, 1
    %s53 = scalar_select %p50, %s51, %s52
    %p56 = pneg %p50
    %p57 = scmp.eq.s32.totalorder %s14, 1
    %p58 = por %p56, %p57
    %p59 = scmp.ne.s32.totalorder %s51, %s54
    %p60 = scmp.eq.s32.totalorder %s14, 0
    %p61 = por %p59, %p60
    %p62 = scmp.ne.s32.totalorder %s51, %s54
    %p63 = scmp.eq.s32.totalorder %s19, 1
    %p64 = por %p62, %p63
    %p65 = scmp.ne.s32.totalorder %s54, %s55
    %p66 = scmp.eq.s32.totalorder %s19, 0
    %p67 = por %p65, %p66
    %p68 = scmp.ne.s32.totalorder %s54, %s55
    %p69 = scmp.eq.s32.totalorder %s20, 1
    %p70 = por %p68, %p69
    %p72 = scmp.ne.s32.totalorder %s55, %s71
    %p73 = scmp.eq.s32.totalorder %s20, 0
    %p74 = por %p72, %p73
    %s76 = sadd.s32 %s75, 1
    %p79 = scmp.eq.s32.totalorder %s14, 1
    %p80 = scmp.ne.s32.totalorder %s75, %s77
    %p81 = scmp.eq.s32.totalorder %s14, 0
    %p82 = por %p80, %p81
    %p83 = scmp.ne.s32.totalorder %s75, %s77
    %p84 = scmp.eq.s32.totalorder %s19, 1
    %p85 = por %p83, %p84
    %p86 = scmp.ne.s32.totalorder %s77, %s78
    %p87 = scmp.eq.s32.totalorder %s19, 0
    %p88 = por %p86, %p87
    %p89 = scmp.ne.s32.totalorder %s77, %s78
    %p90 = scmp.eq.s32.totalorder %s20, 1
    %p91 = por %p89, %p90
    %p93 = scmp.ne.s32.totalorder %s78, %s92
    %p94 = scmp.eq.s32.totalorder %s20, 0
    %p95 = por %p93, %p94
    %s97 = sadd.s32 %s96, 1
    %p100 = scmp.eq.s32.totalorder %s14, 1
    %p101 = scmp.ne.s32.totalorder %s96, %s98
    %p102 = scmp.eq.s32.totalorder %s14, 0
    %p103 = por %p101, %p102
    %p104 = scmp.ne.s32.totalorder %s96, %s98
    %p105 = scmp.eq.s32.totalorder %s19, 1
    %p106 = por %p104, %p105
    %p107 = scmp.ne.s32.totalorder %s98, %s99
    %p108 = scmp.eq.s32.totalorder %s19, 0
    %p109 = por %p107, %p108
    %p110 = scmp.ne.s32.totalorder %s98, %s99
    %p111 = scmp.eq.s32.totalorder %s20, 1
    %p112 = por %p110, %p111
    %p114 = scmp.ne.s32.totalorder %s99, %s113
    %p115 = scmp.eq.s32.totalorder %s20, 0
    %p116 = por %p114, %p115
    %s118 = sadd.s32 %s117, 1
    %p121 = scmp.eq.s32.totalorder %s14, 1
    %p122 = scmp.ne.s32.totalorder %s117, %s119
    %p123 = scmp.eq.s32.totalorder %s14, 0
    %p124 = por %p122, %p123
    %p125 = scmp.ne.s32.totalorder %s117, %s119
    %p126 = scmp.eq.s32.totalorder %s19, 1
    %p127 = por %p125, %p126
    %p128 = scmp.ne.s32.totalorder %s119, %s120
    %p129 = scmp.eq.s32.totalorder %s19, 0
    %p130 = por %p128, %p129
    %p131 = scmp.ne.s32.totalorder %s119, %s120
    %p132 = scmp.eq.s32.totalorder %s20, 1
    %p133 = por %p131, %p132
    %p135 = scmp.ne.s32.totalorder %s120, %s134
    %p136 = scmp.eq.s32.totalorder %s20, 0
    %p137 = por %p135, %p136
    %s139 = sadd.s32 %s138, 1
    %p142 = scmp.eq.s32.totalorder %s14, 1
    %p143 = scmp.ne.s32.totalorder %s138, %s140
    %p144 = scmp.eq.s32.totalorder %s14, 0
    %p145 = por %p143, %p144
    %p146 = scmp.ne.s32.totalorder %s138, %s140
    %p147 = scmp.eq.s32.totalorder %s19, 1
    %p148 = por %p146, %p147
    %p149 = scmp.ne.s32.totalorder %s140, %s141
    %p150 = scmp.eq.s32.totalorder %s19, 0
    %p151 = por %p149, %p150
    %p152 = scmp.ne.s32.totalorder %s140, %s141
    %p153 = scmp.eq.s32.totalorder %s20, 1
    %p154 = por %p152, %p153
    %p156 = scmp.ne.s32.totalorder %s141, %s155
    %p157 = scmp.eq.s32.totalorder %s20, 0
    %p158 = por %p156, %p157
    %s159 = ssub.s32 %s21, %s40
    %s160 = ssub.s32 %s22, %s36
    %s161 = sor.u32 %s159, %s160
    %p162 = scmp.eq.s32.totalorder %s161, 0
    %s164 = sadd.s32 %s163, 1
    %s165 = scalar_select %p162, %s163, %s164
    %p168 = pneg %p162
    %p169 = scmp.eq.s32.totalorder %s14, 1
    %p170 = por %p168, %p169
    %p171 = scmp.ne.s32.totalorder %s163, %s166
    %p172 = scmp.eq.s32.totalorder %s14, 0
    %p173 = por %p171, %p172
    %p174 = scmp.ne.s32.totalorder %s163, %s166
    %p175 = scmp.eq.s32.totalorder %s19, 1
    %p176 = por %p174, %p175
    %p177 = scmp.ne.s32.totalorder %s166, %s167
    %p178 = scmp.eq.s32.totalorder %s19, 0
    %p179 = por %p177, %p178
    %p180 = scmp.ne.s32.totalorder %s166, %s167
    %p181 = scmp.eq.s32.totalorder %s20, 1
    %p182 = por %p180, %p181
    %p184 = scmp.ne.s32.totalorder %s167, %s183
    %p185 = scmp.eq.s32.totalorder %s20, 0
    %p186 = por %p184, %p185
    %s187 = ssub.s32 %s21, %s40
    %s188 = ssub.s32 %s22, %s36
    %s189 = sor.u32 %s187, %s188
    %p190 = scmp.eq.s32.totalorder %s189, 0
    %s192 = sadd.s32 %s191, 1
    %s193 = scalar_select %p190, %s191, %s192
    %p196 = pneg %p190
    %p197 = scmp.eq.s32.totalorder %s14, 1
    %p198 = por %p196, %p197
    %p199 = scmp.ne.s32.totalorder %s191, %s194
    %p200 = scmp.eq.s32.totalorder %s14, 0
    %p201 = por %p199, %p200
    %p202 = scmp.ne.s32.totalorder %s191, %s194
    %p203 = scmp.eq.s32.totalorder %s19, 1
    %p204 = por %p202, %p203
    %p205 = scmp.ne.s32.totalorder %s194, %s195
    %p206 = scmp.eq.s32.totalorder %s19, 0
    %p207 = por %p205, %p206
    %p208 = scmp.ne.s32.totalorder %s194, %s195
    %p209 = scmp.eq.s32.totalorder %s20, 1
    %p210 = por %p208, %p209
    %p212 = scmp.ne.s32.totalorder %s195, %s211
    %p213 = scmp.eq.s32.totalorder %s20, 0
    %p214 = por %p212, %p213
    %s215 = ssub.s32 %s21, %s40
    %s216 = ssub.s32 %s22, %s36
    %s217 = sor.u32 %s215, %s216
    %p218 = scmp.eq.s32.totalorder %s217, 0
    %s220 = sadd.s32 %s219, 1
    %s221 = scalar_select %p218, %s219, %s220
    %p224 = pneg %p218
    %p225 = scmp.eq.s32.totalorder %s14, 1
    %p226 = por %p224, %p225
    %p227 = scmp.ne.s32.totalorder %s219, %s222
    %p228 = scmp.eq.s32.totalorder %s14, 0
    %p229 = por %p227, %p228
    %p230 = scmp.ne.s32.totalorder %s219, %s222
    %p231 = scmp.eq.s32.totalorder %s19, 1
    %p232 = por %p230, %p231
    %p233 = scmp.ne.s32.totalorder %s222, %s223
    %p234 = scmp.eq.s32.totalorder %s19, 0
    %p235 = por %p233, %p234
    %p236 = scmp.ne.s32.totalorder %s222, %s223
    %p237 = scmp.eq.s32.totalorder %s20, 1
    %p238 = por %p236, %p237
    %p240 = scmp.ne.s32.totalorder %s223, %s239
    %p241 = scmp.eq.s32.totalorder %s20, 0
    %p242 = por %p240, %p241
    %p243 = scmp.le.s32.totalorder 1, %s14
    %p244 = scmp.lt.s32.totalorder %s14, 3
    %p245 = pnand %p243, %p244
    %p246 = pneg %p245
    // Predicated region
    $region9: #{ver2c_forward.1} parent=5 // pred_check
      _
    $region10: #{ver2c_forward.1} parent=5 // pred_check_branch
      %248 = sbr.rel (%p245) target = $region12
    $region11: #{ver2c_forward.1} parent=5 // pred_region
      %s249 = ssub.s32 %s14, 1
      // Predicated region
      $region13: #{ver2c_forward.1} parent=11 // pred_check
        %p250 = pneg %p88
      $region14: #{ver2c_forward.1} parent=11 // pred_check_branch
        %252 = sbr.rel (%p250) target = $region16
      $region15: #{ver2c_forward.1} parent=11 // pred_region
        _
      $region16: #{ver2c_forward.1} parent=11 // pred_fallthru
        _
      // Predicated region
      $region17: #{ver2c_forward.1} parent=11 // pred_check
        %p253 = pneg %p109
      $region18: #{ver2c_forward.1} parent=11 // pred_check_branch
        %255 = sbr.rel (%p253) target = $region20
      $region19: #{ver2c_forward.1} parent=11 // pred_region
        _
      $region20: #{ver2c_forward.1} parent=11 // pred_fallthru
        _
      // Predicated region
      $region21: #{ver2c_forward.1} parent=11 // pred_check
        %p256 = pneg %p130
      $region22: #{ver2c_forward.1} parent=11 // pred_check_branch
        %258 = sbr.rel (%p256) target = $region24
      $region23: #{ver2c_forward.1} parent=11 // pred_region
        _
      $region24: #{ver2c_forward.1} parent=11 // pred_fallthru
        _
      // Predicated region
      $region25: #{ver2c_forward.1} parent=11 // pred_check
        %p259 = pneg %p151
      $region26: #{ver2c_forward.1} parent=11 // pred_check_branch
        %261 = sbr.rel (%p259) target = $region28
      $region27: #{ver2c_forward.1} parent=11 // pred_region
        _
      $region28: #{ver2c_forward.1} parent=11 // pred_fallthru
        _
    $region12: #{ver2c_forward.1} parent=5 // pred_fallthru
      _
    %p262 = scmp.lt.s32.totalorder %s14, 2
    // Predicated region
    $region29: #{ver2c_forward.1} parent=5 // pred_check
      %p263 = pneg %p262
    $region30: #{ver2c_forward.1} parent=5 // pred_check_branch
      %265 = sbr.rel (%p263) target = $region32
    $region31: #{ver2c_forward.1} parent=5 // pred_region
      // Predicated region
      $region33: #{ver2c_forward.1} parent=31 // pred_check
        %p266 = pneg %p61
      $region34: #{ver2c_forward.1} parent=31 // pred_check_branch
        %268 = sbr.rel (%p266) target = $region36
      $region35: #{ver2c_forward.1} parent=31 // pred_region
        %s269 = sadd.s32 %s22, %s23
        %p270 = scmp.lt.s32.totalorder %s269, 0
        %s271 = scalar_select %p270, %s269, 0
        %p272 = scmp.lt.s32.totalorder %s21, 1
        %s273 = scalar_select %p272, %s21, 1
        %p274 = scmp.lt.s32.totalorder %s271, 0
        %s275 = scalar_select %p274, %s271, 0
        %s276 = sadd.s32 %s275, %s273
        %s277 = smul.addr %s276, 4
        %s278 = scalar_lea.vmem %s0, %s277
        %s279 = sadd.s32 %s22, %s23
        %p280 = scmp.lt.s32.totalorder %s279, 0
        %s281 = scalar_select %p280, %s279, 0
      $region36: #{ver2c_forward.1} parent=31 // pred_fallthru
        _
    $region32: #{ver2c_forward.1} parent=5 // pred_fallthru
      _
    %p282 = scmp.le.s32.totalorder 1, %s14
    %p283 = scmp.lt.s32.totalorder %s14, 3
    %p284 = pnand %p282, %p283
    %p285 = pneg %p284
    // Predicated region
    $region37: #{ver2c_forward.1} parent=5 // pred_check
      _
    $region38: #{ver2c_forward.1} parent=5 // pred_check_branch
      %287 = sbr.rel (%p284) target = $region40
    $region39: #{ver2c_forward.1} parent=5 // pred_region
      %s288 = ssub.s32 %s14, 1
      %s289 = sadd.s32 %s25, %s26
      %p290 = scmp.lt.s32.totalorder %s289, 0
      %s291 = scalar_select %p290, %s289, 0
      %p292 = scmp.lt.s32.totalorder %s24, 1
      %s293 = scalar_select %p292, %s24, 1
      %p294 = scmp.lt.s32.totalorder %s291, 0
      %s295 = scalar_select %p294, %s291, 0
      %s296 = sadd.s32 %s295, %s293
      %s297 = smul.addr %s296, 4
      %s298 = scalar_lea.vmem %s0, %s297
      %p299 = pneg %p67
      %p300 = pneg %p64
      %p301 = pneg %p88
      %p302 = pneg %p85
      %p303 = pneg %p109
      %p304 = pneg %p106
      %p305 = pneg %p130
      %p306 = pneg %p127
      %p307 = pneg %p151
      %p308 = pneg %p148
      %p309 = pneg %p179
      %p310 = pneg %p176
      %p311 = scmp.lt.s32.totalorder %s24, 1
      %s312 = scalar_select %p311, %s24, 1
      %p313 = scmp.lt.s32.totalorder %s25, 0
      %s314 = scalar_select %p313, %s25, 0
      %s315 = sadd.s32 %s314, %s312
      %s316 = smul.addr %s315, 4
      %s317 = scalar_lea.vmem %s5, %s316
      %p318 = pneg %p207
      %p319 = pneg %p204
      %p320 = scmp.lt.s32.totalorder %s24, 1
      %s321 = scalar_select %p320, %s24, 1
      %p322 = scmp.lt.s32.totalorder %s25, 0
      %s323 = scalar_select %p322, %s25, 0
      %s324 = sadd.s32 %s323, %s321
      %s325 = smul.addr %s324, 4
      %s326 = scalar_lea.vmem %s6, %s325
      %p327 = pneg %p235
      %p328 = pneg %p232
      %p329 = scmp.lt.s32.totalorder %s24, 1
      %s330 = scalar_select %p329, %s24, 1
      %p331 = scmp.lt.s32.totalorder %s25, 0
      %s332 = scalar_select %p331, %s25, 0
      %s333 = sadd.s32 %s332, %s330
      %s334 = smul.addr %s333, 4
      %s335 = scalar_lea.vmem %s7, %s334
      %s336 = sadd.s32 %s25, %s26
      %p337 = scmp.lt.s32.totalorder %s336, 0
      %s338 = scalar_select %p337, %s336, 0
      %p339 = scmp.lt.s32.totalorder %s24, 1
      %s340 = scalar_select %p339, %s24, 1
      %p341 = scmp.lt.s32.totalorder %s338, 0
      %s342 = scalar_select %p341, %s338, 0
      %s343 = sadd.s32 %s342, %s340
      %s344 = smul.addr %s343, 4
      %s345 = scalar_lea.vmem %s0, %s344
      %s346 = sadd.s32 %s25, %s26
      %p347 = scmp.lt.s32.totalorder %s346, 0
      %s348 = scalar_select %p347, %s346, 0
      %p349 = scmp.lt.s32.totalorder %s24, 1
      %s350 = scalar_select %p349, %s24, 1
      %p351 = scmp.lt.s32.totalorder %s25, 0
      %s352 = scalar_select %p351, %s25, 0
      %s353 = sadd.s32 %s352, %s350
      %s354 = smul.addr %s353, 4
      %s355 = scalar_lea.vmem %s5, %s354
      %p356 = scmp.lt.s32.totalorder %s24, 1
      %s357 = scalar_select %p356, %s24, 1
      %p358 = scmp.lt.s32.totalorder %s25, 0
      %s359 = scalar_select %p358, %s25, 0
      %s360 = sadd.s32 %s359, %s357
      %s361 = smul.addr %s360, 4
      %s362 = scalar_lea.vmem %s6, %s361
      %p363 = scmp.lt.s32.totalorder %s24, 1
      %s364 = scalar_select %p363, %s24, 1
      %p365 = scmp.lt.s32.totalorder %s25, 0
      %s366 = scalar_select %p365, %s25, 0
      %s367 = sadd.s32 %s366, %s364
      %s368 = smul.addr %s367, 4
      %s369 = scalar_lea.vmem %s7, %s368
      %p371 = scmp.eq.s32.totalorder %s26, 0
      // Predicated region
      $region41: #{ver2c_forward.1} parent=39 // pred_check
        %p372 = pneg %p371
      $region42: #{ver2c_forward.1} parent=39 // pred_check_branch
        %374 = sbr.rel (%p372) target = $region44
      $region43: #{ver2c_forward.1} parent=39 // pred_region
        %vm375 = vcmask 3072
        %376 = vst.msk [vmem:[%s355] sm:$0xf] %vm375, -inf
        %377 = vst.msk [vmem:[%s362] sm:$0xf] %vm375, 0.0
        %378 = vst.msk [vmem:[%s369] sm:$0xf] %vm375, 0.0
      $region44: #{ver2c_forward.1} parent=39 // pred_fallthru
        _
      %v379 = vld [vmem:[%s345] sm:$0xf]
      %v380 = vunpack.c.l.bf16 %v379
      %v381 = vmul.f32 %v380, %v380
      %vm382 = vcmask 261120
      %v383 = vsel %vm382, %v381, 0.0
      %384 = vadd.xlane.f32.xlu0 %v383
      %v385 = vpop.xlane.xlu0 %384
      %v386 = vmax.f32 %v385, 1e-24
      %v387 = vrsqrt.pop %v386
      %v388 = vmul.f32 %v387, %v386
      %v389 = vmul.f32 %v388, %v387
      %v390 = vmul.f32 0.5, %v389
      %v391 = vsub.f32 1.5, %v390
      %v392 = vmul.f32 %v387, %v391
      %vm393 = vweird.f32 %v386
      %vm394 = vweird.f32 %v387
      %vm395 = vmor %vm393, %vm394
      %v396 = vsel %vm395, %v387, %v392
      %v397 = vmul.f32 %v380, %v396
      %v398 = vpack.c.bf16 %v397, %v397
      %v399 = vld [vmem:[%s1] sm:$0xf]
      %v400 = vld [vmem:[%s1 + $0x4] sm:$0xf]
      %v401 = vld [vmem:[%s1 + $0x8] sm:$0xf]
      %v402 = vld [vmem:[%s1 + $0xc] sm:$0xf]
      %v403 = vld [vmem:[%s2] sm:$0x1]
      %v405 = vperm.slane %v403, 0
      %v411 = vunpack.c.l.b16 %v399
      %v412 = vunpack.c.l.b16 %v400
      %v413 = vunpack.c.l.b16 %v401
      %v414 = vunpack.c.l.b16 %v402
      %v415 = vpack.c.b16 %v412, %v411
      %v416 = vpack.c.b16 %v414, %v413
      %v420 = vsel %vm382, %v398, 0
      %422 = vmatpush.bf16.msra.mxu0 0
      %423 = vmatpush.bf16.msra.mxu0 0
      %424 = vmatpush.bf16.msra.mxu0 0
      %425 = vmatpush.bf16.msra.mxu0 0
      %426 = vmatpush.bf16.msra.mxu0 0
      %427 = vmatpush.bf16.msra.mxu0 0
      %428 = vmatpush.bf16.msra.mxu0 %v416
      %429 = vmatpush.bf16.msra.mxu0 %v415
      %430 = vmatmul.bf16.gmra.mxu0 %v420
      %v431 = vpop.f32.mrf.mxu0
      %v432 = vadd.f32 %v405, %v431
      %v433 = vpop.f32.mrf.mxu0
      %434 = vdwg.mxu0
      %v435 = vmul.f32 %v432, %v432
      %v436 = vsel %vm382, %v435, 0.0
      %437 = vadd.xlane.f32.xlu0 %v436
      %v438 = vpop.xlane.xlu0 %437
      %v439 = vmax.f32 %v438, 1e-24
      %v440 = vrsqrt.pop %v439
      %v441 = vmul.f32 %v440, %v439
      %v442 = vmul.f32 %v441, %v440
      %v443 = vmul.f32 0.5, %v442
      %v444 = vsub.f32 1.5, %v443
      %v445 = vmul.f32 %v440, %v444
      %vm446 = vweird.f32 %v439
      %vm447 = vweird.f32 %v440
      %vm448 = vmor %vm446, %vm447
      %v449 = vsel %vm448, %v440, %v445
      %v450 = vmul.f32 %v432, %v449
      %v451 = vpack.c.bf16 %v450, %v450
      %v452 = vld [vmem:[%s3] sm:$0xf]
      %v454 = vsel %vm382, %v452, 0
      %v457 = vsel %vm382, %v451, 0
      %459 = vmatpush.bf16.xpose.msra.mxu0 0
      %460 = vmatpush.bf16.xpose.msra.mxu0 0
      %461 = vmatpush.bf16.xpose.msra.mxu0 0
      %462 = vmatpush.bf16.xpose.msra.mxu0 0
      %463 = vmatpush.bf16.xpose.msra.mxu0 0
      %464 = vmatpush.bf16.xpose.msra.mxu0 0
      %465 = vmatpush.bf16.xpose.msra.mxu0 0
      %466 = vmatpush.bf16.xpose.msra.mxu0 %v457
      %467 = vmatmul.bf16.gmra.mxu0 %v454
      %v468 = vpop.f32.mrf.mxu0
      %v469 = vadd.f32 0.0, %v468
      %v470 = vpop.f32.mrf.mxu0
      %471 = vdwg.mxu0
      %vm472 = vcmask 64512
      %v473 = vsel %vm472, %v469, -inf
      %v474 = vrot.slane %v473, 4
      %v475 = vmax.f32 %v473, %v474
      %v476 = vrot.slane %v475, 2
      %v477 = vmax.f32 %v475, %v476
      %v478 = vrot.slane %v477, 1
      %v479 = vmax.f32 %v477, %v478
      %v480 = vsub.f32 %v469, %v479
      %v481 = vmul.f32 %v480, 1.442695
      %v482 = vpow.pop %v481
      %v483 = vsel %vm472, %v482, 0.0
      %v484 = vrot.slane %v483, 4
      %v485 = vadd.f32 %v483, %v484
      %v486 = vrot.slane %v485, 2
      %v487 = vadd.f32 %v485, %v486
      %v488 = vrot.slane %v487, 1
      %v489 = vadd.f32 %v487, %v488
      %v490 = vrcp.pop %v489
      %v491 = vmul.f32 %v482, %v490
      %v492 = vld [vmem:[%s4] sm:$0xf]
      %v494 = vsel %vm472, %v492, 0
      %496 = vmatpush.msra.mxu0 0.0
      %497 = vmatpush.msra.mxu0 0.0
      %498 = vmatpush.msra.mxu0 0.0
      %499 = vmatpush.msra.mxu0 0.0
      %500 = vmatpush.msra.mxu0 0.0
      %501 = vmatpush.msra.mxu0 0.0
      %502 = vmatpush.msra.mxu0 0.0
      %503 = vmatpush.msra.mxu0 0.0
      %504 = vmatpush.msra.mxu0 0.0
      %505 = vmatpush.msra.mxu0 0.0
      %506 = vmatpush.msra.mxu0 0.0
      %507 = vmatpush.msra.mxu0 0.0
      %508 = vmatpush.msra.mxu0 0.0
      %509 = vmatpush.msra.mxu0 0.0
      %510 = vmatpush.msra.mxu0 0.0
      %511 = vmatpush.msra.mxu0 %v491
      %512 = vmatmul.f32.gmra.mxu0 %v494
      %v513 = vpop.f32.mrf.mxu0
      %v514 = vadd.f32 0.0, %v513
      %515 = vdwg.mxu0
      %v516 = vld [vmem:[%s355] sm:$0xf]
      %vm517 = vcmask 60416
      %v518 = vsel %vm517, %v514, -inf
      %519 = vmax.xlane.f32.xlu0 %v518
      %v520 = vpop.xlane.xlu0 %519
      %v521 = vmax.f32 %v516, %v520
      %v522 = vsub.f32 %v516, %v521
      %v523 = vmul.f32 %v522, 1.442695
      %v524 = vpow.pop %v523
      %526 = vset.pattern.permute.xlu0 0
      %527 = vperm.xlu0 %526, %v521
      %v528 = vpop.permute.xlu0 %527
      %v530 = vsub.f32 %v514, %v528
      %v531 = vmul.f32 %v530, 1.442695
      %v532 = vpow.pop %v531
      %v533 = vld [vmem:[%s362] sm:$0xf]
      %v534 = vmul.f32 %v524, %v533
      %v535 = vsel %vm517, %v532, 0.0
      %536 = vadd.xlane.f32.xlu0 %v535
      %v537 = vpop.xlane.xlu0 %536
      %v538 = vadd.f32 %v534, %v537
      %vm539 = vcmask 3072
      %540 = vst.msk [vmem:[%s362] sm:$0xf] %vm539, %v538
      %v541 = vld [vmem:[%s369] sm:$0xf]
      %v542 = vmul.f32 %v524, %v541
      %v543 = vmul.f32 %v532, %v514
      %v544 = vsel %vm517, %v543, 0.0
      %545 = vadd.xlane.f32.xlu0 %v544
      %v546 = vpop.xlane.xlu0 %545
      %v547 = vadd.f32 %v542, %v546
      %548 = vst.msk [vmem:[%s369] sm:$0xf] %vm539, %v547
      %549 = vst.msk [vmem:[%s355] sm:$0xf] %vm539, %v521
      %p550 = scmp.lt.s32.totalorder %s24, 1
      %s551 = scalar_select %p550, %s24, 1
      %p552 = scmp.lt.s32.totalorder %s25, 0
      %s553 = scalar_select %p552, %s25, 0
      %s554 = sadd.s32 %s553, %s551
      %s555 = smul.addr %s554, 4
      %s556 = scalar_lea.vmem %s5, %s555
      %p557 = scmp.lt.s32.totalorder %s24, 1
      %s558 = scalar_select %p557, %s24, 1
      %p559 = scmp.lt.s32.totalorder %s25, 0
      %s560 = scalar_select %p559, %s25, 0
      %s561 = sadd.s32 %s560, %s558
      %s562 = smul.addr %s561, 4
      %s563 = scalar_lea.vmem %s6, %s562
      %p564 = scmp.lt.s32.totalorder %s24, 1
      %s565 = scalar_select %p564, %s24, 1
      %p566 = scmp.lt.s32.totalorder %s25, 0
      %s567 = scalar_select %p566, %s25, 0
      %s568 = sadd.s32 %s567, %s565
      %s569 = smul.addr %s568, 4
      %s570 = scalar_lea.vmem %s7, %s569
      // Predicated region
      $region45: #{ver2c_forward.1} parent=39 // pred_check
        %p571 = pneg %p176
      $region46: #{ver2c_forward.1} parent=39 // pred_check_branch
        %573 = sbr.rel (%p571) target = $region48
      $region47: #{ver2c_forward.1} parent=39 // pred_region
        _
      $region48: #{ver2c_forward.1} parent=39 // pred_fallthru
        _
      // Predicated region
      $region49: #{ver2c_forward.1} parent=39 // pred_check
        %p574 = pneg %p204
      $region50: #{ver2c_forward.1} parent=39 // pred_check_branch
        %576 = sbr.rel (%p574) target = $region52
      $region51: #{ver2c_forward.1} parent=39 // pred_region
        _
      $region52: #{ver2c_forward.1} parent=39 // pred_fallthru
        _
      // Predicated region
      $region53: #{ver2c_forward.1} parent=39 // pred_check
        %p577 = pneg %p232
      $region54: #{ver2c_forward.1} parent=39 // pred_check_branch
        %579 = sbr.rel (%p577) target = $region56
      $region55: #{ver2c_forward.1} parent=39 // pred_region
        _
      $region56: #{ver2c_forward.1} parent=39 // pred_fallthru
        _
    $region40: #{ver2c_forward.1} parent=5 // pred_fallthru
      _
    %p580 = scmp.le.s32.totalorder 2, %s14
    // Predicated region
    $region57: #{ver2c_forward.1} parent=5 // pred_check
      %p581 = pneg %p580
    $region58: #{ver2c_forward.1} parent=5 // pred_check_branch
      %583 = sbr.rel (%p581) target = $region60
    $region59: #{ver2c_forward.1} parent=5 // pred_region
      %s584 = ssub.s32 %s14, 2
      // Predicated region
      $region61: #{ver2c_forward.1} parent=59 // pred_check
        %p585 = pneg %p182
      $region62: #{ver2c_forward.1} parent=59 // pred_check_branch
        %587 = sbr.rel (%p585) target = $region64
      $region63: #{ver2c_forward.1} parent=59 // pred_region
        %p588 = scmp.lt.s32.totalorder %s27, 1
        %s589 = scalar_select %p588, %s27, 1
        %p590 = scmp.lt.s32.totalorder %s28, 0
        %s591 = scalar_select %p590, %s28, 0
        %s592 = sadd.s32 %s591, %s589
        %s593 = smul.addr %s592, 4
        %s594 = scalar_lea.vmem %s5, %s593
      $region64: #{ver2c_forward.1} parent=59 // pred_fallthru
        _
      // Predicated region
      $region65: #{ver2c_forward.1} parent=59 // pred_check
        %p595 = pneg %p210
      $region66: #{ver2c_forward.1} parent=59 // pred_check_branch
        %597 = sbr.rel (%p595) target = $region68
      $region67: #{ver2c_forward.1} parent=59 // pred_region
        %p598 = scmp.lt.s32.totalorder %s27, 1
        %s599 = scalar_select %p598, %s27, 1
        %p600 = scmp.lt.s32.totalorder %s28, 0
        %s601 = scalar_select %p600, %s28, 0
        %s602 = sadd.s32 %s601, %s599
        %s603 = smul.addr %s602, 4
        %s604 = scalar_lea.vmem %s6, %s603
      $region68: #{ver2c_forward.1} parent=59 // pred_fallthru
        _
      // Predicated region
      $region69: #{ver2c_forward.1} parent=59 // pred_check
        %p605 = pneg %p238
      $region70: #{ver2c_forward.1} parent=59 // pred_check_branch
        %607 = sbr.rel (%p605) target = $region72
      $region71: #{ver2c_forward.1} parent=59 // pred_region
        %p608 = scmp.lt.s32.totalorder %s27, 1
        %s609 = scalar_select %p608, %s27, 1
        %p610 = scmp.lt.s32.totalorder %s28, 0
        %s611 = scalar_select %p610, %s28, 0
        %s612 = sadd.s32 %s611, %s609
        %s613 = smul.addr %s612, 4
        %s614 = scalar_lea.vmem %s7, %s613
      $region72: #{ver2c_forward.1} parent=59 // pred_fallthru
        _
    $region60: #{ver2c_forward.1} parent=5 // pred_fallthru
      _
  $region6: #{ver2c_forward.1} parent=0 // loop_footer
    %s18 = sadd.s32 1, %s14
  $region7: #{ver2c_forward.1} parent=0 // loop_footer_branch
    %13 = sbr.rel target = $region3
  $region8: #{ver2c_forward.1} parent=0 // loop_exit
    _

</llo_original>
